<compile_context>
chip_gen: v7x
topology: tpu7x:2x2x1
jax: 0.10.0
libtpu: 0.0.40
codegen_flags: <defaults>
</compile_context>

<pallas_src>
import functools

import jax
import jax.numpy as jnp
from jax.experimental import pallas as pl
from jax.experimental.pallas import tpu as pltpu

_IGNORE_INDEX = -100
_NEG_BIG = -1e9          # finite "-inf": exp(_NEG_BIG - m) == 0, no inf-inf NaN
_MAX_ROW_TILE = 1024


def _vmem_capacity_bytes():
    """Physical VMEM of the current generation (128 MiB v5e/v6e, 64 MiB v7x)."""
    try:
        cap = getattr(pltpu.get_tpu_info(), "vmem_capacity_bytes", None)
        if cap:
            return int(cap)
    except Exception:
        pass
    return 64 << 20      # conservative fallback (v7x-sized)


def _compute_dtype(in_dtype):
    """Elementwise-math dtype: bf16 on bf16-VALU/EUP parts, f32 otherwise."""
    if jnp.dtype(in_dtype) != jnp.dtype(jnp.bfloat16):
        return jnp.float32
    try:
        kind = jax.devices()[0].device_kind.lower()
    except Exception:
        kind = ""
    for old in ("v2", "v3", "v4", "v5"):     # no bf16 VPU/EUP on these parts
        if old in kind:
            return jnp.float32
    return jnp.bfloat16


def _pick_row_tile(rows, V, in_itemsize, compute_itemsize, vmem_limit):
    """Largest row tile whose working set fits the scoped VMEM budget.

    Budget per row: double-buffered input block + ~2 full-tile compute-dtype
    temporaries + one f32 reduce temp + the lane-padded (rt,128) label block.
    """
    budget = int(vmem_limit * 0.8)
    per_row = V * (2 * in_itemsize + 2 * compute_itemsize + 4) + 1152
    rt = max(8, budget // per_row)
    rt = min(rt, _MAX_ROW_TILE)
    if rt >= rows:
        return rows                      # single block spanning every row
    align = 16 if compute_itemsize == 2 else 8
    rt = max(align, (rt // align) * align)
    return rt


# ----------------------------------------------------------------------------
# Kernel: per-tile partial sum of NLL(logits_row, label) with ignore_index=-100
# ----------------------------------------------------------------------------
def _ce_kernel(logits_ref, labels_ref, out_ref, *, compute_dtype):
    lbl = labels_ref[...]                                   # (rt, 1) int32
    x = logits_ref[...]                                     # (rt, V) input dtype
    if x.dtype != compute_dtype:
        x = x.astype(compute_dtype)                         # f32 path (f32 in / v5e)
    rt, V = x.shape

    col = jax.lax.broadcasted_iota(jnp.int32, (rt, V), 1)
    if V % 128 != 0:
        # Guard the lane-padded tail of an unaligned vocab (e.g. 32001): force
        # padding lanes to a large finite negative so max / sum-exp ignore it.
        x = jnp.where(col < V, x, jnp.asarray(_NEG_BIG, x.dtype))

    m = jnp.max(x, axis=-1, keepdims=True)
    xs = x - m               # shared pass: the +m of lse and picked cancels
    # Accumulate the reduces in f32 even when xs is bf16.
    sum_exp = jnp.sum(jnp.exp(xs), axis=-1, keepdims=True, dtype=jnp.float32)
    picked = jnp.sum(jnp.where(col == lbl, xs, jnp.zeros_like(xs)),
                     axis=-1, keepdims=True, dtype=jnp.float32)

    # where (not multiply): garbage in out-of-bounds tail rows never leaks.
    valid = lbl != _IGNORE_INDEX
    nll = jnp.where(valid, jnp.log(sum_exp) - picked, 0.0)   # (rt, 1) f32

    # Per-tile partial sum splatted over exactly one (8,128) f32 vreg:
    # a single dense, unmasked vector store per grid step.
    out_ref[...] = jnp.full((8, 128), jnp.sum(nll), dtype=jnp.float32)


def cross_entropy_loss(logits, labels, reduction="mean"):
    """CE over non-ignored targets of logits[:, :-1, :] vs labels[:, 1:]."""
    B, T, V = logits.shape
    in_dtype = logits.dtype
    in_itemsize = jnp.dtype(in_dtype).itemsize
    compute_dtype = _compute_dtype(in_dtype)
    compute_itemsize = jnp.dtype(compute_dtype).itemsize

    vmem_cap = _vmem_capacity_bytes()
    vmem_limit = min(int(vmem_cap * 3 // 4), 96 << 20)   # 96 MiB v5e/v6e, 48 MiB v7x

    rows = B * T
    rt = _pick_row_tile(rows, V, in_itemsize, compute_itemsize, vmem_limit)
    nrt = pl.cdiv(rows, rt)
    rows_pad = nrt * rt

    # (B, T, V) -> (B*T, V) is a trivial contiguous reshape: logits consumed in
    # place, and the grid becomes one long "parallel" axis (v7x core balance).
    logits2d = logits.reshape(rows, V)

    # Only the tiny label array is shifted / padded on the host side: flat row
    # b*T + t is scored against labels[b, t+1]; the last position of every
    # sequence and the padded tail rows get ignore_index.
    shift_labels = labels[:, 1:].astype(jnp.int32)                      # (B, T-1)
    flat_labels = jnp.pad(shift_labels, ((0, 0), (0, 1)),
                          constant_values=_IGNORE_INDEX).reshape(rows)
    flat_labels = jnp.pad(flat_labels, (0, rows_pad - rows),
                          constant_values=_IGNORE_INDEX)
    labels_col = flat_labels.reshape(rows_pad, 1)

    cost = pl.CostEstimate(
        flops=int(6 * rows * V),
        transcendentals=int(rows * V),
        bytes_accessed=int(rows * V * in_itemsize + rows_pad * 4 + nrt * 4096),
    )

    tile_sums = pl.pallas_call(
        functools.partial(_ce_kernel, compute_dtype=compute_dtype),
        out_shape=jax.ShapeDtypeStruct((nrt, 8, 128), jnp.float32),
        grid=(nrt,),
        in_specs=[
            pl.BlockSpec((rt, V), lambda r: (r, 0)),
            pl.BlockSpec((rt, 1), lambda r: (r, 0)),
        ],
        out_specs=pl.BlockSpec((None, 8, 128), lambda r: (r, 0, 0)),
        compiler_params=pltpu.CompilerParams(
            dimension_semantics=("parallel",),
            vmem_limit_bytes=vmem_limit),
        cost_estimate=cost,
    )(logits2d, labels_col)

    total = jnp.sum(tile_sums[:, 0, 0])
    cnt = jnp.sum((shift_labels != _IGNORE_INDEX).astype(jnp.float32))
    if reduction == "sum":
        return total, cnt
    # reduction='mean' over non-ignored targets (0/0 -> NaN, matching torch)
    return total / cnt, cnt


# ----------------------------------------------------------------------------
# Forward pass of CopilotCriterionsNumPP (mlp_bce=False)
# ----------------------------------------------------------------------------
def copilot_criterions_num_pp(output, label, vocab_size, reduction="mean"):
    labels = label[0].astype(jnp.int32)          # labels = label[0].to(int64)
    num_labels = label[2]
    logits = output[0]
    num_logits = output[1]
    assert logits.shape[-1] == vocab_size

    lm_loss, _ = cross_entropy_loss(logits, labels, reduction=reduction)

    # num head: only B*T elements -> plain XLA (a pallas_call launch would cost
    # more than the work); the CE cost_estimate lets XLA overlap this with it.
    nl = num_labels.reshape(-1).astype(jnp.float32)
    ng = num_logits.reshape(-1).astype(jnp.float32)
    mask = nl != -100.0
    num_sum = jnp.sum(jnp.abs(jnp.where(mask, ng, 0.0) - jnp.where(mask, nl, 0.0)))
    num_cnt = jnp.sum(mask.astype(jnp.float32))
    num_loss = num_sum
    if reduction == "mean":
        num_loss = jnp.where(num_cnt > 0, num_sum / num_cnt, num_sum)

    # TODO(synk): mlp_bce branch (BCEWithLogits on yes/no tokens) is disabled
    # in the module (self.mlp_bce = False), so bce_loss is the constant 0.
    bce_loss = jnp.float32(0.0)

    total_loss = lm_loss + num_loss + bce_loss
    loss_log = {"lm_loss": lm_loss, "num_loss": num_loss, "bce_loss": bce_loss}
    return total_loss, loss_log


# ----------------------------------------------------------------------------
# Self-test
# ----------------------------------------------------------------------------
def _reference_total(logits, labels, num_logits, num_labels):
    B, T, V = logits.shape
    sl = logits[:, :-1, :].reshape(-1, V).astype(jnp.float32)
    st = labels[:, 1:].reshape(-1).astype(jnp.int32)
    valid = st != _IGNORE_INDEX
    logp = jax.nn.log_softmax(sl, axis=-1)
    pick = jnp.take_along_axis(logp, jnp.clip(st, 0)[:, None], axis=-1)[:, 0]
    ce = -jnp.sum(jnp.where(valid, pick, 0.0)) / jnp.sum(valid)
    nm = num_labels.reshape(-1) != -100.0
    l1 = jnp.sum(jnp.abs(jnp.where(nm, num_logits.reshape(-1) -
                                   num_labels.reshape(-1), 0.0)))
    l1 = jnp.where(jnp.sum(nm) > 0, l1 / jnp.sum(nm), l1)
    return ce + l1


def _run_case(key, B, T, V, name, dtype=jnp.float32, tol=1e-3):
    k1, k2, k3, k4 = jax.random.split(key, 4)
    logits = jax.random.normal(k1, (B, T, V), dtype=jnp.float32).astype(dtype)
    labels = jax.random.randint(k2, (B, T), 0, V).astype(jnp.int32)
    labels = labels.at[0, 3].set(_IGNORE_INDEX)          # exercise ignore_index
    num_logits = jax.random.normal(k3, (B, T), dtype=jnp.float32)
    num_labels = jax.random.normal(k4, (B, T), dtype=jnp.float32)
    num_labels = num_labels.at[1, 2:5].set(-100.0)       # exercise num mask

    total, _ = copilot_criterions_num_pp((logits, num_logits),
                                         (labels, None, num_labels),
                                         vocab_size=V)
    total = jax.block_until_ready(total)

    ref = _reference_total(logits, labels, num_logits, num_labels)
    assert jnp.abs(total - ref) < tol * (1.0 + jnp.abs(ref)), \
        (name, float(total), float(ref))


if __name__ == "__main__":
    key = jax.random.PRNGKey(0)
    k1, k2, k3, k4 = jax.random.split(key, 4)
    # Small case consistent with the module (batch=2, seq=8).
    _run_case(k1, B=2, T=8, V=512, name="small_f32")
    # Module-default-style unaligned vocab (32001): exercises the lane-padded
    # tail guard for V % 128 != 0.
    _run_case(k2, B=2, T=8, V=32001, name="vocab_32001")
    # Larger case: exercises row tiling, the ragged trailing logits block and
    # the -100-padded label tail rows.
    _run_case(k3, B=2, T=520, V=256, name="tiled_f32")
    # bf16 logits: halves HBM read traffic; elementwise math stays bf16 on
    # v6e/v7x with f32 accumulation of the reduces (f32 math on v5e).
    _run_case(k4, B=2, T=8, V=512, name="small_bf16",
              dtype=jnp.bfloat16, tol=3e-2)
    print("KERNEL_OK")
</pallas_src>

<mosaic_0001>
module attributes {stable_mosaic.version = 11 : i64} {
  func.func @_ce_kernel(%arg0: i32, %arg1: memref<16x512xf32, #tpu.memory_space<vmem>>, %arg2: memref<16x1xi32, #tpu.memory_space<vmem>>, %arg3: memref<1x8x128xf32, #tpu.memory_space<vmem>>) attributes {dimension_semantics = [#tpu.dimension_semantics<parallel>], iteration_bounds = array<i64: 1>, scalar_prefetch = 0 : i64, scratch_operands = 0 : i64, tpu.core_type = #tpu.core_type<tc>, window_params = [{transform_indices = @transform_0, window_bounds = array<i64: 16, 512>}, {transform_indices = @transform_1, window_bounds = array<i64: 16, 1>}, {transform_indices = @transform_2, window_bounds = array<i64: 1, 8, 128>}]} {
    %c0 = arith.constant 0 : index
    %c0_0 = arith.constant 0 : index
    %0 = vector.load %arg2[%c0, %c0_0] : memref<16x1xi32, #tpu.memory_space<vmem>>, vector<16x1xi32>
    %c0_1 = arith.constant 0 : index
    %c0_2 = arith.constant 0 : index
    %1 = vector.load %arg1[%c0_1, %c0_2] : memref<16x512xf32, #tpu.memory_space<vmem>>, vector<16x512xf32>
    %2 = tpu.iota {dimensions = array<i32: 1>} : vector<16x512xi32>
    %cst = arith.constant dense<0xFF800000> : vector<16xf32>
    %3 = vector.multi_reduction <maximumf>, %1, %cst [1] : vector<16x512xf32> to vector<16xf32>
    %4 = vector.shape_cast %3 : vector<16xf32> to vector<16x1xf32>
    %5 = vector.broadcast %4 : vector<16x1xf32> to vector<16x512xf32>
    %6 = arith.subf %1, %5 : vector<16x512xf32>
    %7 = math.exp %6 : vector<16x512xf32>
    %cst_3 = arith.constant dense<0.000000e+00> : vector<16xf32>
    %8 = vector.multi_reduction <add>, %7, %cst_3 [1] : vector<16x512xf32> to vector<16xf32>
    %9 = vector.shape_cast %8 : vector<16xf32> to vector<16x1xf32>
    %10 = vector.broadcast %0 : vector<16x1xi32> to vector<16x512xi32>
    %11 = arith.cmpi eq, %2, %10 : vector<16x512xi32>
    %cst_4 = arith.constant 0.000000e+00 : f32
    %12 = vector.broadcast %cst_4 : f32 to vector<16x512xf32>
    %13 = arith.select %11, %6, %12 : vector<16x512xi1>, vector<16x512xf32>
    %cst_5 = arith.constant dense<0.000000e+00> : vector<16xf32>
    %14 = vector.multi_reduction <add>, %13, %cst_5 [1] : vector<16x512xf32> to vector<16xf32>
    %15 = vector.shape_cast %14 : vector<16xf32> to vector<16x1xf32>
    %c-100_i32 = arith.constant -100 : i32
    %16 = vector.broadcast %c-100_i32 : i32 to vector<16x1xi32>
    %17 = arith.cmpi ne, %0, %16 : vector<16x1xi32>
    %18 = math.log %9 : vector<16x1xf32>
    %19 = arith.subf %18, %15 : vector<16x1xf32>
    %cst_6 = arith.constant 0.000000e+00 : f32
    %20 = vector.broadcast %cst_6 : f32 to vector<16x1xf32>
    %21 = arith.select %17, %19, %20 : vector<16x1xi1>, vector<16x1xf32>
    %22 = vector.shape_cast %21 : vector<16x1xf32> to vector<1x16x1xf32>
    %cst_7 = arith.constant dense<0.000000e+00> : vector<1xf32>
    %23 = vector.multi_reduction <add>, %22, %cst_7 [1, 2] : vector<1x16x1xf32> to vector<1xf32>
    %24 = vector.shape_cast %23 : vector<1xf32> to vector<1x1x1xf32>
    %25 = vector.extract %24[0, 0, 0] : f32 from vector<1x1x1xf32>
    %26 = vector.broadcast %25 : f32 to vector<8x128xf32>
    %c0_8 = arith.constant 0 : index
    %c0_9 = arith.constant 0 : index
    %c0_10 = arith.constant 0 : index
    %27 = vector.load %arg3[%c0_8, %c0_9, %c0_10] : memref<1x8x128xf32, #tpu.memory_space<vmem>>, vector<1x8x128xf32>
    %28 = vector.shape_cast %27 : vector<1x8x128xf32> to vector<8x128xf32>
    %29 = vector.shape_cast %26 : vector<8x128xf32> to vector<1x8x128xf32>
    tpu.vector_store %arg3[%c0_8, %c0_9, %c0_10], %29 {strides = array<i32>} : memref<1x8x128xf32, #tpu.memory_space<vmem>>, vector<1x8x128xf32>,
    return
  }
  func.func @transform_0(%arg0: i32) -> (i32, i32) {
    %c0_i32 = arith.constant 0 : i32
    %c0_i32_0 = arith.constant 0 : i32
    return %arg0, %c0_i32 : i32, i32
  }
  func.func @transform_1(%arg0: i32) -> (i32, i32) {
    %c0_i32 = arith.constant 0 : i32
    %c0_i32_0 = arith.constant 0 : i32
    return %arg0, %c0_i32 : i32, i32
  }
  func.func @transform_2(%arg0: i32) -> (i32, i32, i32) {
    %c0_i32 = arith.constant 0 : i32
    %c0_i32_0 = arith.constant 0 : i32
    %c0_i32_1 = arith.constant 0 : i32
    return %arg0, %c0_i32, %c0_i32_0 : i32, i32, i32
  }
}

</mosaic_0001>

<llo_original>
// kernel: tpu_custom_call.1
$region0: #{tpu_custom_call.1}
  #allocation0 [shape = 'u32[]', space=smem, size = 0x4, offset = 0x4, fixed_abs, tag = 'smem constant byte address 0x4 - core index']
  #allocation1 [shape = 'u32[144,128]{1,0:T(1,128)}', space=vmem, size = 0x12000, scoped, tag = 'internal scratch']
  %s0 = inlined_call_operand.hbm [shape: f32[16,512], index: 0, kind: input, shape index: {}]
  %s1 = inlined_call_operand.vmem [shape: s32[16,1], index: 1, kind: input, shape index: {}]
  %s2 = inlined_call_operand.hbm [shape: f32[1,8,128], index: 2, kind: output, shape index: {}]
  %s3 = sld [smem:[#allocation0]]
  $region22: #{tpu_custom_call.1} parent=0
    _
  %s5 = ssub.s32 1, %s3
  %s6 = scalar_select 0, %s5, %s3
  $region1: #{tpu_custom_call.1} parent=0
    #allocation2 [shape = 'u8[32768]{0}', space=vmem, size = 0x8000, scoped, tag = 'input window, operand 0, single buffered']
    #allocation3 [shape = 's32[1]{0}', space=sflag, size = 0x4, scoped, tag = 'scoped memory for tpu_custom_call.1']
    #allocation4 [shape = 's32[1]{0}', space=sflag, size = 0x4, scoped, tag = 'scoped memory for tpu_custom_call.1']
    #allocation5 [shape = 'u8[4096]{0}', space=vmem, size = 0x1000, scoped, tag = 'output window, operand 0, single buffered']
    %7 = vsyncpa [#allocation3], 0
    %8 = vsyncpa [#allocation4], 0
    // Predicated region
    $region2: #{tpu_custom_call.1} parent=1 // pred_check
      _
    $region3: #{tpu_custom_call.1} parent=1 // pred_check_branch
      %10 = sbr.rel (0) target = $region5
    $region4: #{tpu_custom_call.1} parent=1 // pred_region
      %s12 = ssub.s32 1024, 1024
      %13 = vsyncadd [#allocation3], %s12
      %s14 = sshll.u32 [#allocation2], 4
      %s15 = int_to_ptr.vmem [resolvable:$true] %s14
      %20 = dma.hbm_to_vmem [thread:$0]  %s0, 1024, %s15, [#allocation3], 512, 512, 32
    $region5: #{tpu_custom_call.1} parent=1 // pred_fallthru
      _
    // Predicated region
    $region6: #{tpu_custom_call.1} parent=1 // pred_check
      _
    $region7: #{tpu_custom_call.1} parent=1 // pred_check_branch
      %22 = sbr.rel (0) target = $region9
    $region8: #{tpu_custom_call.1} parent=1 // pred_region
      _
    $region9: #{tpu_custom_call.1} parent=1 // pred_fallthru
      _
    // Predicated region
    $region10: #{tpu_custom_call.1} parent=1 // pred_check
      _
    $region11: #{tpu_custom_call.1} parent=1 // pred_check_branch
      %24 = sbr.rel (0) target = $region13
    $region12: #{tpu_custom_call.1} parent=1 // pred_region
      %25 = dma.done [#allocation3], 1024
    $region13: #{tpu_custom_call.1} parent=1 // pred_fallthru
      _
    %v26 = vld [vmem:[%s1] sm:$0xff]
    %v27 = vld [vmem:[%s1 + $0x8] sm:$0xff]
    %v28 = vld [vmem:[#allocation2] sm:$0xff]
    %v29 = vld [vmem:[#allocation2 + $0x8] sm:$0xff]
    %v30 = vld [vmem:[#allocation2 + $0x10] sm:$0xff]
    %v31 = vld [vmem:[#allocation2 + $0x18] sm:$0xff]
    %v32 = vld [vmem:[#allocation2 + $0x20] sm:$0xff]
    %v33 = vld [vmem:[#allocation2 + $0x28] sm:$0xff]
    %v34 = vld [vmem:[#allocation2 + $0x30] sm:$0xff]
    %v35 = vld [vmem:[#allocation2 + $0x38] sm:$0xff]
    %v36 = vlaneseq
    %v37 = vand.u32 %v36, 127
    %v38 = vadd.s32 %v37, 128
    %v39 = vadd.s32 %v37, 256
    %v40 = vadd.s32 %v37, 384
    %v41 = vmax.f32 %v28, %v30
    %v42 = vmax.f32 %v29, %v31
    %v43 = vmax.f32 %v41, %v42
    %44 = vmax.xlane.f32.xlu0 %v43
    %v45 = vpop.xlane.xlu0 %44
    %v46 = vmax.f32 %v32, %v34
    %v47 = vmax.f32 %v33, %v35
    %v48 = vmax.f32 %v46, %v47
    %49 = vmax.xlane.f32.xlu0 %v48
    %v50 = vpop.xlane.xlu0 %49
    %v51 = vsub.f32 %v28, %v45
    %v52 = vsub.f32 %v29, %v45
    %v53 = vsub.f32 %v30, %v45
    %v54 = vsub.f32 %v31, %v45
    %v55 = vsub.f32 %v32, %v50
    %v56 = vsub.f32 %v33, %v50
    %v57 = vsub.f32 %v34, %v50
    %v58 = vsub.f32 %v35, %v50
    %v59 = vmul.f32 %v51, 1.442695
    %v60 = vpow.pop %v59
    %v61 = vmul.f32 %v52, 1.442695
    %v62 = vpow.pop %v61
    %v63 = vmul.f32 %v53, 1.442695
    %v64 = vpow.pop %v63
    %v65 = vmul.f32 %v54, 1.442695
    %v66 = vpow.pop %v65
    %v67 = vmul.f32 %v55, 1.442695
    %v68 = vpow.pop %v67
    %v69 = vmul.f32 %v56, 1.442695
    %v70 = vpow.pop %v69
    %v71 = vmul.f32 %v57, 1.442695
    %v72 = vpow.pop %v71
    %v73 = vmul.f32 %v58, 1.442695
    %v74 = vpow.pop %v73
    %v75 = vadd.f32 %v60, %v62
    %v76 = vadd.f32 %v75, %v64
    %v77 = vadd.f32 %v76, %v66
    %78 = vadd.xlane.f32.xlu0 %v77
    %v79 = vpop.xlane.xlu0 %78
    %v80 = vadd.f32 %v68, %v70
    %v81 = vadd.f32 %v80, %v72
    %v82 = vadd.f32 %v81, %v74
    %83 = vadd.xlane.f32.xlu0 %v82
    %v84 = vpop.xlane.xlu0 %83
    %85 = vset.pattern.permute.xlu0 0
    %86 = vperm.xlu0 %85, %v26
    %v87 = vpop.permute.xlu0 %86
    %88 = vset.pattern.permute.xlu0 0
    %89 = vperm.xlu0 %88, %v27
    %v90 = vpop.permute.xlu0 %89
    %vm91 = vcmp.eq.s32.totalorder %v37, %v87
    %vm92 = vcmp.eq.s32.totalorder %v38, %v87
    %vm93 = vcmp.eq.s32.totalorder %v39, %v87
    %vm94 = vcmp.eq.s32.totalorder %v40, %v87
    %vm95 = vcmp.eq.s32.totalorder %v37, %v90
    %vm96 = vcmp.eq.s32.totalorder %v38, %v90
    %vm97 = vcmp.eq.s32.totalorder %v39, %v90
    %vm98 = vcmp.eq.s32.totalorder %v40, %v90
    %v99 = vsel %vm91, %v51, 0.0
    %v100 = vsel %vm92, %v52, 0.0
    %v101 = vsel %vm93, %v53, 0.0
    %v102 = vsel %vm94, %v54, 0.0
    %v103 = vsel %vm95, %v55, 0.0
    %v104 = vsel %vm96, %v56, 0.0
    %v105 = vsel %vm97, %v57, 0.0
    %v106 = vsel %vm98, %v58, 0.0
    %v107 = vadd.f32 %v99, %v100
    %v108 = vadd.f32 %v107, %v101
    %v109 = vadd.f32 %v108, %v102
    %110 = vadd.xlane.f32.xlu0 %v109
    %v111 = vpop.xlane.xlu0 %110
    %v112 = vadd.f32 %v103, %v104
    %v113 = vadd.f32 %v112, %v105
    %v114 = vadd.f32 %v113, %v106
    %115 = vadd.xlane.f32.xlu0 %v114
    %v116 = vpop.xlane.xlu0 %115
    %vm117 = vcmp.ne.s32.totalorder %v26, 4294967196
    %vm118 = vcmp.ne.s32.totalorder %v27, 4294967196
    %v119 = vlog2.pop %v79
    %v120 = vmul.f32 %v119, 0.6931472
    %v121 = vlog2.pop %v84
    %v122 = vmul.f32 %v121, 0.6931472
    %v123 = vsub.f32 %v120, %v111
    %v124 = vsub.f32 %v122, %v116
    %v125 = vsel %vm117, %v123, 0.0
    %v126 = vsel %vm118, %v124, 0.0
    %vm127 = vcmask 7168
    %v128 = vsel %vm127, %v125, 0.0
    %v129 = vsel %vm127, %v126, 0.0
    %v130 = vadd.f32 %v128, %v129
    %131 = vadd.xlane.f32.xlu0 %v130
    %v132 = vpop.xlane.xlu0 %131
    %v133 = vrot.slane %v132, 4
    %v134 = vadd.f32 %v132, %v133
    %v135 = vrot.slane %v134, 2
    %v136 = vadd.f32 %v134, %v135
    %v137 = vrot.slane %v136, 1
    %v138 = vadd.f32 %v136, %v137
    %s139 = vtos %v138
    %v140 = vstv %s139
    %141 = vst [vmem:[#allocation5] sm:$0xff] %v140
    // Predicated region
    $region14: #{tpu_custom_call.1} parent=1 // pred_check
      _
    $region15: #{tpu_custom_call.1} parent=1 // pred_check_branch
      %143 = sbr.rel (0) target = $region17
    $region16: #{tpu_custom_call.1} parent=1 // pred_region
      %s145 = ssub.s32 128, 128
      %146 = vsyncadd [#allocation4], %s145
      %s148 = sshll.u32 [#allocation5], 4
      %s149 = int_to_ptr.vmem [resolvable:$true] %s148
      %151 = dma.vmem_to_hbm [thread:$0]  %s149, 128, %s2, [#allocation4]
    $region17: #{tpu_custom_call.1} parent=1 // pred_fallthru
      _
    // Predicated region
    $region18: #{tpu_custom_call.1} parent=1 // pred_check
      _
    $region19: #{tpu_custom_call.1} parent=1 // pred_check_branch
      %153 = sbr.rel (0) target = $region21
    $region20: #{tpu_custom_call.1} parent=1 // pred_region
      %154 = dma.done [#allocation4], 128
    $region21: #{tpu_custom_call.1} parent=1 // pred_fallthru
      _
    %155 = vsyncpa [#allocation3], 1
    %156 = vsyncpa [#allocation4], 1

</llo_original>
